<compile_context>
chip_gen: v5e
topology: v5e:2x2
jax: 0.10.0
libtpu: 0.0.40
codegen_flags: <defaults>
</compile_context>

<pallas_src>
import functools

import jax
import jax.numpy as jnp
from jax.experimental import pallas as pl
from jax.experimental.pallas import tpu as pltpu


# ---------------------------------------------------------------------------
# Kernel
# ---------------------------------------------------------------------------
def _critic_fused_kernel(saT_ref, w_ref, qT_ref, *, in_dim, H2, n_heads, r3):
    """One batch tile, transposed layout.

    saT_ref : (in_dim, TB)           state||action, batch on lanes
    w_ref   : (2*H2 + r3 + H2, W)    packed [W1ᵀ | W2ᵀ | W3ᵀ | biases]
    qT_ref  : (n_heads, TB)          row h = Q of fused head h
    """
    wdt = w_ref.dtype

    x = saT_ref[...]
    if x.dtype != wdt:                      # trace-time branch
        x = x.astype(wdt)

    # Static, zero-cost views into the single packed weight buffer.
    w1T = w_ref[0:H2, 0:in_dim]                       # (H2, in_dim)
    w2T = w_ref[H2:2 * H2, 0:H2]                      # (H2, H2)  block-diag
    w3T = w_ref[2 * H2:2 * H2 + n_heads, 0:H2]        # (n,  H2)  block-diag
    boff = 2 * H2 + r3
    b1 = w_ref[boff:boff + H2, 0:1]                   # (H2, 1) -> lane bcast
    b2 = w_ref[boff:boff + H2, 1:2]                   # (H2, 1)
    b3 = w_ref[boff:boff + n_heads, 2:3]              # (n,  1)

    # Layer 1: (H2, in_dim) @ (in_dim, TB) -> (H2, TB), f32 accumulation.
    h = jnp.dot(w1T, x, preferred_element_type=jnp.float32) + b1
    h = jnp.maximum(h, 0.0)
    if wdt != jnp.float32:
        h = h.astype(wdt)

    # Layer 2: block-diagonal fused hidden->hidden.
    h = jnp.dot(w2T, h, preferred_element_type=jnp.float32) + b2
    h = jnp.maximum(h, 0.0)
    if wdt != jnp.float32:
        h = h.astype(wdt)

    # Layer 3: fused (n, H2) head -> lane-dense (n, TB) output.
    q = jnp.dot(w3T, h, preferred_element_type=jnp.float32) + b3
    qT_ref[...] = q.astype(qT_ref.dtype)


# ---------------------------------------------------------------------------
# Parameter packing (done once, outside the hot path)
# ---------------------------------------------------------------------------
def pack_heads(heads, weight_dtype=jnp.float32):
    """Fuse N MLP heads (each (w1,b1,w2,b2,w3,b3), w: (fan_in, fan_out)) into
    one transposed, block-diagonal weight buffer consumed by the kernel.

    Packing critic + target-critic (or an ensemble) here widens the fused
    MXU dimension (4 heads -> 128 cols) at no extra per-step cost.
    """
    n = len(heads)
    in_dim, H = heads[0][0].shape
    H2 = n * H
    W = max(H2, in_dim)                                   # pack width
    r3 = ((n + 7) // 8) * 8                               # sublane-aligned W3ᵀ rows

    w1T = jnp.concatenate([h[0] for h in heads], axis=1).T            # (H2, in_dim)
    w2T = jax.scipy.linalg.block_diag(*[h[2] for h in heads]).T       # (H2, H2)
    w3T = jax.scipy.linalg.block_diag(*[h[4] for h in heads]).T       # (n,  H2)
    b1T = jnp.concatenate([h[1] for h in heads], axis=1).T            # (H2, 1)
    b2T = jnp.concatenate([h[3] for h in heads], axis=1).T            # (H2, 1)
    b3T = jnp.concatenate([h[5] for h in heads], axis=1).T            # (n,  1)

    pad_cols = lambda m: jnp.pad(m, ((0, 0), (0, W - m.shape[1])))
    blk_w1 = pad_cols(w1T)                                            # (H2, W)
    blk_w2 = pad_cols(w2T)                                            # (H2, W)
    blk_w3 = pad_cols(jnp.pad(w3T, ((0, r3 - n), (0, 0))))            # (r3, W)
    bias = jnp.concatenate(
        [b1T, b2T, jnp.pad(b3T, ((0, H2 - n), (0, 0)))], axis=1)      # (H2, 3)
    blk_b = pad_cols(bias)                                            # (H2, W)

    wpack = jnp.concatenate([blk_w1, blk_w2, blk_w3, blk_b],
                            axis=0).astype(weight_dtype)
    return {"wpack": wpack, "in_dim": in_dim, "H2": H2,
            "n_heads": n, "r3": r3}


def pack_critic_params(params, weight_dtype=jnp.float32):
    """Twin-Q fusion for the Critic module (q1, q2)."""
    return pack_heads([params["q1"], params["q2"]], weight_dtype)


# ---------------------------------------------------------------------------
# Wrapper
# ---------------------------------------------------------------------------
def _choose_tb(B, *, tb_max=4096, min_tiles=2, single_tile_max=1024):
    """Batch-tile policy: one big tile for small B (no pipeline overhead);
    for large B, >= min_tiles lane-dense (multiple-of-128) tiles so v7x's
    two TensorCores both get work (harmless on 1-TC v5e/v6e)."""
    if B <= single_tile_max:
        return B
    tb = -(-B // min_tiles)              # cdiv
    tb = ((tb + 127) // 128) * 128       # lane-dense tiles -> unmasked stores
    return min(tb, tb_max)


def critic_forward(s, a, packed, *, tb_max=4096):
    """Returns (q1, q2), each (B, 1) float32 — same semantics as Critic.forward."""
    B = s.shape[0]
    in_dim, H2 = packed["in_dim"], packed["H2"]
    n, r3 = packed["n_heads"], packed["r3"]
    wpack = packed["wpack"]

    # Concat + transpose in the wrapper (cheap XLA ops): batch lands on lanes.
    saT = jnp.concatenate([s, a], axis=1).T            # (in_dim, B)
    if saT.dtype != wpack.dtype:
        saT = saT.astype(wpack.dtype)                  # bf16 path: cast once here

    TB = _choose_tb(B, tb_max=tb_max)
    grid = (pl.cdiv(B, TB),)

    kernel = functools.partial(_critic_fused_kernel,
                               in_dim=in_dim, H2=H2, n_heads=n, r3=r3)

    flops = 2 * B * (in_dim * H2 + H2 * H2 + H2 * n)
    bytes_accessed = (saT.size * saT.dtype.itemsize
                      + wpack.size * wpack.dtype.itemsize
                      + B * n * 4)

    qT = pl.pallas_call(
        kernel,
        out_shape=jax.ShapeDtypeStruct((n, B), jnp.float32),
        grid=grid,
        in_specs=[
            pl.BlockSpec((in_dim, TB), lambda i: (0, i)),       # activations tile
            pl.BlockSpec(wpack.shape, lambda i: (0, 0)),        # weights: resident
        ],
        out_specs=pl.BlockSpec((n, TB), lambda i: (0, i)),      # lane-dense store
        compiler_params=pltpu.CompilerParams(
            dimension_semantics=("parallel",)),
        cost_estimate=pl.CostEstimate(flops=flops, transcendentals=0,
                                      bytes_accessed=bytes_accessed),
    )(saT, wpack)

    q1 = qT[0:1, :].T                                   # (B, 1)
    q2 = qT[1:2, :].T                                   # (B, 1)
    return q1, q2


def critic_Q1(s, a, packed):
    """Mirror of the module's Q1(): fused kernel computes both, return q1."""
    q1, _ = critic_forward(s, a, packed)
    return q1


# ---------------------------------------------------------------------------
# Parameter init + pure-JAX reference (PyTorch-equivalent semantics)
# ---------------------------------------------------------------------------
def init_linear(key, fan_in, fan_out):
    """PyTorch nn.Linear default init: U(-1/sqrt(fan_in), 1/sqrt(fan_in))."""
    kw, kb = jax.random.split(key)
    bound = 1.0 / jnp.sqrt(jnp.float32(fan_in))
    w = jax.random.uniform(kw, (fan_in, fan_out), jnp.float32, -bound, bound)
    b = jax.random.uniform(kb, (1, fan_out), jnp.float32, -bound, bound)
    return w, b


def init_critic_params(key, s_dim, a_dim, hidden):
    keys = jax.random.split(key, 6)
    in_dim = s_dim + a_dim
    q1 = (*init_linear(keys[0], in_dim, hidden),
          *init_linear(keys[1], hidden, hidden),
          *init_linear(keys[2], hidden, 1))
    q2 = (*init_linear(keys[3], in_dim, hidden),
          *init_linear(keys[4], hidden, hidden),
          *init_linear(keys[5], hidden, 1))
    return {"q1": q1, "q2": q2}


def reference_forward(s, a, params):
    sa = jnp.concatenate([s, a], axis=-1)

    def mlp(p):
        w1, b1, w2, b2, w3, b3 = p
        h1 = jnp.maximum(sa @ w1 + b1, 0.0)
        h2 = jnp.maximum(h1 @ w2 + b2, 0.0)
        return h2 @ w3 + b3

    return mlp(params["q1"]), mlp(params["q2"])


# ---------------------------------------------------------------------------
if __name__ == "__main__":
    S_DIM, A_DIM, HIDDEN = 12, 4, 32

    key = jax.random.PRNGKey(0)
    k_p, k_s, k_a, k_s2, k_a2 = jax.random.split(key, 5)
    params = init_critic_params(k_p, S_DIM, A_DIM, HIDDEN)
    packed_f32 = pack_critic_params(params, weight_dtype=jnp.float32)

    # --- small batch: single tile -------------------------------------------
    B = 2
    s = jax.random.normal(k_s, (B, S_DIM), jnp.float32)
    a = jax.random.normal(k_a, (B, A_DIM), jnp.float32)
    q1_ref, q2_ref = reference_forward(s, a, params)

    q1, q2 = critic_forward(s, a, packed_f32)
    q1 = jax.block_until_ready(q1)
    q2 = jax.block_until_ready(q2)
    assert q1.shape == (B, 1) and q2.shape == (B, 1)
    assert jnp.allclose(q1, q1_ref, atol=1e-4, rtol=1e-4)
    assert jnp.allclose(q2, q2_ref, atol=1e-4, rtol=1e-4)
    assert jnp.allclose(critic_Q1(s, a, packed_f32), q1_ref, atol=1e-4, rtol=1e-4)

    # --- larger batch: multi-tile grid, lane-dense tiles, partial last tile --
    B2 = 1027
    s2 = jax.random.normal(k_s2, (B2, S_DIM), jnp.float32)
    a2 = jax.random.normal(k_a2, (B2, A_DIM), jnp.float32)
    q1b_ref, q2b_ref = reference_forward(s2, a2, params)

    q1b, q2b = critic_forward(s2, a2, packed_f32)
    q1b = jax.block_until_ready(q1b)
    assert q1b.shape == (B2, 1) and q2b.shape == (B2, 1)
    assert jnp.allclose(q1b, q1b_ref, atol=1e-4, rtol=1e-4)
    assert jnp.allclose(q2b, q2b_ref, atol=1e-4, rtol=1e-4)

    # --- bf16 weights + activations (v6e/v7x bandwidth path), f32 accum ------
    packed_bf16 = pack_critic_params(params, weight_dtype=jnp.bfloat16)
    q1c, q2c = critic_forward(s2, a2, packed_bf16)
    q1c = jax.block_until_ready(q1c)
    assert jnp.allclose(q1c, q1b_ref, atol=1e-1, rtol=1e-1)
    assert jnp.allclose(q2c, q2b_ref, atol=1e-1, rtol=1e-1)

    print("KERNEL_OK")
</pallas_src>

<mosaic_0001>
module attributes {stable_mosaic.version = 11 : i64} {
  func.func @_critic_fused_kernel(%arg0: i32, %arg1: memref<16x2xf32, #tpu.memory_space<vmem>>, %arg2: memref<200x64xf32, #tpu.memory_space<vmem>>, %arg3: memref<2x2xf32, #tpu.memory_space<vmem>>) attributes {dimension_semantics = [#tpu.dimension_semantics<parallel>], iteration_bounds = array<i64: 1>, scalar_prefetch = 0 : i64, scratch_operands = 0 : i64, tpu.core_type = #tpu.core_type<tc>, window_params = [{transform_indices = @transform_0, window_bounds = array<i64: 16, 2>}, {pipeline_mode = #tpu.pipeline_mode<synchronous>, transform_indices = @transform_1, window_bounds = array<i64: 200, 64>}, {transform_indices = @transform_2, window_bounds = array<i64: 2, 2>}]} {
    %c0 = arith.constant 0 : index
    %c0_0 = arith.constant 0 : index
    %0 = vector.load %arg1[%c0, %c0_0] : memref<16x2xf32, #tpu.memory_space<vmem>>, vector<16x2xf32>
    %c0_1 = arith.constant 0 : index
    %c0_2 = arith.constant 0 : index
    %1 = vector.load %arg2[%c0_1, %c0_2] : memref<200x64xf32, #tpu.memory_space<vmem>>, vector<64x16xf32>
    %c64 = arith.constant 64 : index
    %c0_3 = arith.constant 0 : index
    %2 = vector.load %arg2[%c64, %c0_3] : memref<200x64xf32, #tpu.memory_space<vmem>>, vector<64x64xf32>
    %c128 = arith.constant 128 : index
    %c0_4 = arith.constant 0 : index
    %3 = vector.load %arg2[%c128, %c0_4] : memref<200x64xf32, #tpu.memory_space<vmem>>, vector<2x64xf32>
    %c136 = arith.constant 136 : index
    %c0_5 = arith.constant 0 : index
    %4 = vector.load %arg2[%c136, %c0_5] : memref<200x64xf32, #tpu.memory_space<vmem>>, vector<64x1xf32>
    %c136_6 = arith.constant 136 : index
    %c1 = arith.constant 1 : index
    %5 = vector.load %arg2[%c136_6, %c1] : memref<200x64xf32, #tpu.memory_space<vmem>>, vector<64x1xf32>
    %c136_7 = arith.constant 136 : index
    %c2 = arith.constant 2 : index
    %6 = vector.load %arg2[%c136_7, %c2] : memref<200x64xf32, #tpu.memory_space<vmem>>, vector<2x1xf32>
    %cst = arith.constant dense<0.000000e+00> : vector<64x2xf32>
    %7 = tpu.matmul %1, %0, %cst {dimension_numbers = #tpu.dot_dimension_numbers<[1], [0], [0], [1], [0, 0, 1, 1], [], []>} : vector<64x16xf32>, vector<16x2xf32>, vector<64x2xf32> -> vector<64x2xf32>
    %8 = vector.broadcast %4 : vector<64x1xf32> to vector<64x2xf32>
    %9 = arith.addf %7, %8 : vector<64x2xf32>
    %cst_8 = arith.constant 0.000000e+00 : f32
    %10 = vector.broadcast %cst_8 : f32 to vector<64x2xf32>
    %11 = arith.maximumf %9, %10 : vector<64x2xf32>
    %cst_9 = arith.constant dense<0.000000e+00> : vector<64x2xf32>
    %12 = tpu.matmul %2, %11, %cst_9 {dimension_numbers = #tpu.dot_dimension_numbers<[1], [0], [0], [1], [0, 0, 1, 1], [], []>} : vector<64x64xf32>, vector<64x2xf32>, vector<64x2xf32> -> vector<64x2xf32>
    %13 = vector.broadcast %5 : vector<64x1xf32> to vector<64x2xf32>
    %14 = arith.addf %12, %13 : vector<64x2xf32>
    %cst_10 = arith.constant 0.000000e+00 : f32
    %15 = vector.broadcast %cst_10 : f32 to vector<64x2xf32>
    %16 = arith.maximumf %14, %15 : vector<64x2xf32>
    %cst_11 = arith.constant dense<0.000000e+00> : vector<2x2xf32>
    %17 = tpu.matmul %3, %16, %cst_11 {dimension_numbers = #tpu.dot_dimension_numbers<[1], [0], [0], [1], [0, 0, 1, 1], [], []>} : vector<2x64xf32>, vector<64x2xf32>, vector<2x2xf32> -> vector<2x2xf32>
    %18 = vector.broadcast %6 : vector<2x1xf32> to vector<2x2xf32>
    %19 = arith.addf %17, %18 : vector<2x2xf32>
    %c0_12 = arith.constant 0 : index
    %c0_13 = arith.constant 0 : index
    %20 = vector.load %arg3[%c0_12, %c0_13] : memref<2x2xf32, #tpu.memory_space<vmem>>, vector<2x2xf32>
    tpu.vector_store %arg3[%c0_12, %c0_13], %19 {strides = array<i32>} : memref<2x2xf32, #tpu.memory_space<vmem>>, vector<2x2xf32>,
    return
  }
  func.func @transform_0(%arg0: i32) -> (i32, i32) {
    %c0_i32 = arith.constant 0 : i32
    %c0_i32_0 = arith.constant 0 : i32
    return %c0_i32, %arg0 : i32, i32
  }
  func.func @transform_1(%arg0: i32) -> (i32, i32) {
    %c0_i32 = arith.constant 0 : i32
    %c0_i32_0 = arith.constant 0 : i32
    %c0_i32_1 = arith.constant 0 : i32
    return %c0_i32, %c0_i32_0 : i32, i32
  }
  func.func @transform_2(%arg0: i32) -> (i32, i32) {
    %c0_i32 = arith.constant 0 : i32
    %c0_i32_0 = arith.constant 0 : i32
    return %c0_i32, %arg0 : i32, i32
  }
}

</mosaic_0001>

<llo_original>
// kernel: tpu_custom_call.1
$region0: #{tpu_custom_call.1}
  #allocation0 [shape = 'u32[]', space=smem, size = 0x4, offset = 0x4, fixed_abs, tag = 'smem constant byte address 0x4 - core index']
  #allocation1 [shape = 'u32[72,128]{1,0:T(1,128)}', space=vmem, size = 0x9000, scoped, tag = 'internal scratch']
  %s0 = inlined_call_operand.vmem [shape: f32[16,2], index: 0, kind: input, shape index: {}]
  %s1 = inlined_call_operand.vmem [shape: f32[200,64], index: 1, kind: input, shape index: {}]
  %s2 = inlined_call_operand.hbm [shape: f32[2,2], index: 2, kind: output, shape index: {}]
  %s3 = sld [smem:[#allocation0]]
  $region18: #{tpu_custom_call.1} parent=0
    _
  %s5 = ssub.s32 1, %s3
  %s6 = scalar_select 0, %s5, %s3
  $region1: #{tpu_custom_call.1} parent=0
    #allocation2 [shape = 'u8[1024]{0}', space=vmem, size = 0x400, scoped, tag = 'output window, operand 0, single buffered']
    #allocation3 [shape = 's32[1]{0}', space=sflag, size = 0x4, scoped, tag = 'scoped memory for tpu_custom_call.1']
    %7 = vsyncpa [#allocation3], 0
    // Predicated region
    $region2: #{tpu_custom_call.1} parent=1 // pred_check
      _
    $region3: #{tpu_custom_call.1} parent=1 // pred_check_branch
      %9 = sbr.rel (0) target = $region5
    $region4: #{tpu_custom_call.1} parent=1 // pred_region
      _
    $region5: #{tpu_custom_call.1} parent=1 // pred_fallthru
      _
    // Predicated region
    $region6: #{tpu_custom_call.1} parent=1 // pred_check
      _
    $region7: #{tpu_custom_call.1} parent=1 // pred_check_branch
      %11 = sbr.rel (0) target = $region9
    $region8: #{tpu_custom_call.1} parent=1 // pred_region
      _
    $region9: #{tpu_custom_call.1} parent=1 // pred_fallthru
      _
    %v12 = vld [vmem:[%s0] sm:$0xff]
    %v13 = vld [vmem:[%s0 + $0x8] sm:$0xff]
    %v14 = vld [vmem:[%s1] sm:$0xff]
    %v15 = vld [vmem:[%s1 + $0x8] sm:$0xff]
    %v16 = vld [vmem:[%s1 + $0x10] sm:$0xff]
    %v17 = vld [vmem:[%s1 + $0x18] sm:$0xff]
    %v18 = vld [vmem:[%s1 + $0x20] sm:$0xff]
    %v19 = vld [vmem:[%s1 + $0x28] sm:$0xff]
    %v20 = vld [vmem:[%s1 + $0x30] sm:$0xff]
    %v21 = vld [vmem:[%s1 + $0x38] sm:$0xff]
    %v22 = vld [vmem:[%s1 + $0x40] sm:$0xff]
    %v23 = vld [vmem:[%s1 + $0x48] sm:$0xff]
    %v24 = vld [vmem:[%s1 + $0x50] sm:$0xff]
    %v25 = vld [vmem:[%s1 + $0x58] sm:$0xff]
    %v26 = vld [vmem:[%s1 + $0x60] sm:$0xff]
    %v27 = vld [vmem:[%s1 + $0x68] sm:$0xff]
    %v28 = vld [vmem:[%s1 + $0x70] sm:$0xff]
    %v29 = vld [vmem:[%s1 + $0x78] sm:$0xff]
    %v30 = vld [vmem:[%s1 + $0x80] sm:$0x3]
    %v31 = vld [vmem:[%s1 + $0x88] sm:$0xff]
    %v32 = vld [vmem:[%s1 + $0x90] sm:$0xff]
    %v33 = vld [vmem:[%s1 + $0x98] sm:$0xff]
    %v34 = vld [vmem:[%s1 + $0xa0] sm:$0xff]
    %v35 = vld [vmem:[%s1 + $0xa8] sm:$0xff]
    %v36 = vld [vmem:[%s1 + $0xb0] sm:$0xff]
    %v37 = vld [vmem:[%s1 + $0xb8] sm:$0xff]
    %v38 = vld [vmem:[%s1 + $0xc0] sm:$0xff]
    %v39 = vld [vmem:[%s1 + $0x88] sm:$0x3]
    %41 = vset.pattern.permute.xlu0 0
    %42 = vperm.xlu0 %41, %v31
    %v43 = vpop.permute.xlu0 %42
    %46 = vset.pattern.permute.xlu0 0
    %47 = vperm.xlu0 %46, %v32
    %v48 = vpop.permute.xlu0 %47
    %51 = vset.pattern.permute.xlu0 0
    %52 = vperm.xlu0 %51, %v33
    %v53 = vpop.permute.xlu0 %52
    %56 = vset.pattern.permute.xlu0 0
    %57 = vperm.xlu0 %56, %v34
    %v58 = vpop.permute.xlu0 %57
    %61 = vset.pattern.permute.xlu0 0
    %62 = vperm.xlu0 %61, %v35
    %v63 = vpop.permute.xlu0 %62
    %66 = vset.pattern.permute.xlu0 0
    %67 = vperm.xlu0 %66, %v36
    %v68 = vpop.permute.xlu0 %67
    %71 = vset.pattern.permute.xlu0 0
    %72 = vperm.xlu0 %71, %v37
    %v73 = vpop.permute.xlu0 %72
    %76 = vset.pattern.permute.xlu0 0
    %77 = vperm.xlu0 %76, %v38
    %v78 = vpop.permute.xlu0 %77
    %vm80 = vcmask 130048
    %v82 = vsel %vm80, %v14, 0
    %v85 = vsel %vm80, %v15, 0
    %v88 = vsel %vm80, %v16, 0
    %v91 = vsel %vm80, %v17, 0
    %v94 = vsel %vm80, %v18, 0
    %v97 = vsel %vm80, %v19, 0
    %v100 = vsel %vm80, %v20, 0
    %v103 = vsel %vm80, %v21, 0
    %105 = vmatpush.msra.mxu0 0.0
    %106 = vmatpush.msra.mxu0 0.0
    %107 = vmatpush.msra.mxu0 0.0
    %108 = vmatpush.msra.mxu0 0.0
    %109 = vmatpush.msra.mxu0 0.0
    %110 = vmatpush.msra.mxu0 0.0
    %111 = vmatpush.msra.mxu0 0.0
    %112 = vmatpush.msra.mxu0 0.0
    %113 = vmatpush.msra.mxu0 0.0
    %114 = vmatpush.msra.mxu0 0.0
    %115 = vmatpush.msra.mxu0 0.0
    %116 = vmatpush.msra.mxu0 0.0
    %117 = vmatpush.msra.mxu0 0.0
    %118 = vmatpush.msra.mxu0 0.0
    %119 = vmatpush.msra.mxu0 %v13
    %120 = vmatpush.msra.mxu0 %v12
    %121 = vmatmul.f32.gmra.mxu0 %v82
    %v122 = vpop.f32.mrf.mxu0
    %v123 = vadd.f32 %v43, %v122
    %124 = vmatmul.f32.gmra.mxu0 %v85
    %v125 = vpop.f32.mrf.mxu0
    %v126 = vadd.f32 %v48, %v125
    %127 = vmatmul.f32.gmra.mxu0 %v88
    %v128 = vpop.f32.mrf.mxu0
    %v129 = vadd.f32 %v53, %v128
    %130 = vmatmul.f32.gmra.mxu0 %v91
    %v131 = vpop.f32.mrf.mxu0
    %v132 = vadd.f32 %v58, %v131
    %133 = vmatmul.f32.gmra.mxu0 %v94
    %v134 = vpop.f32.mrf.mxu0
    %v135 = vadd.f32 %v63, %v134
    %136 = vmatmul.f32.gmra.mxu0 %v97
    %v137 = vpop.f32.mrf.mxu0
    %v138 = vadd.f32 %v68, %v137
    %139 = vmatmul.f32.gmra.mxu0 %v100
    %v140 = vpop.f32.mrf.mxu0
    %v141 = vadd.f32 %v73, %v140
    %142 = vmatmul.f32.gmra.mxu0 %v103
    %v143 = vpop.f32.mrf.mxu0
    %v144 = vadd.f32 %v78, %v143
    %145 = vdwg.mxu0
    %v146 = vmax.f32 %v123, 0.0
    %v147 = vmax.f32 %v126, 0.0
    %v148 = vmax.f32 %v129, 0.0
    %v149 = vmax.f32 %v132, 0.0
    %v150 = vmax.f32 %v135, 0.0
    %v151 = vmax.f32 %v138, 0.0
    %v152 = vmax.f32 %v141, 0.0
    %v153 = vmax.f32 %v144, 0.0
    %154 = vset.pattern.permute.xlu0 1
    %155 = vperm.xlu0 %154, %v31
    %v156 = vpop.permute.xlu0 %155
    %158 = vset.pattern.permute.xlu0 1
    %159 = vperm.xlu0 %158, %v32
    %v160 = vpop.permute.xlu0 %159
    %162 = vset.pattern.permute.xlu0 1
    %163 = vperm.xlu0 %162, %v33
    %v164 = vpop.permute.xlu0 %163
    %166 = vset.pattern.permute.xlu0 1
    %167 = vperm.xlu0 %166, %v34
    %v168 = vpop.permute.xlu0 %167
    %170 = vset.pattern.permute.xlu0 1
    %171 = vperm.xlu0 %170, %v35
    %v172 = vpop.permute.xlu0 %171
    %174 = vset.pattern.permute.xlu0 1
    %175 = vperm.xlu0 %174, %v36
    %v176 = vpop.permute.xlu0 %175
    %178 = vset.pattern.permute.xlu0 1
    %179 = vperm.xlu0 %178, %v37
    %v180 = vpop.permute.xlu0 %179
    %182 = vset.pattern.permute.xlu0 1
    %183 = vperm.xlu0 %182, %v38
    %v184 = vpop.permute.xlu0 %183
    %vm186 = vcmask 523264
    %v188 = vsel %vm186, %v22, 0
    %v191 = vsel %vm186, %v23, 0
    %v194 = vsel %vm186, %v24, 0
    %v197 = vsel %vm186, %v25, 0
    %v200 = vsel %vm186, %v26, 0
    %v203 = vsel %vm186, %v27, 0
    %v206 = vsel %vm186, %v28, 0
    %v209 = vsel %vm186, %v29, 0
    %211 = vmatpush.msra.mxu0 0.0
    %212 = vmatpush.msra.mxu0 0.0
    %213 = vmatpush.msra.mxu0 0.0
    %214 = vmatpush.msra.mxu0 0.0
    %215 = vmatpush.msra.mxu0 0.0
    %216 = vmatpush.msra.mxu0 0.0
    %217 = vmatpush.msra.mxu0 0.0
    %218 = vmatpush.msra.mxu0 0.0
    %219 = vmatpush.msra.mxu0 %v153
    %220 = vmatpush.msra.mxu0 %v152
    %221 = vmatpush.msra.mxu0 %v151
    %222 = vmatpush.msra.mxu0 %v150
    %223 = vmatpush.msra.mxu0 %v149
    %224 = vmatpush.msra.mxu0 %v148
    %225 = vmatpush.msra.mxu0 %v147
    %226 = vmatpush.msra.mxu0 %v146
    %227 = vmatmul.f32.gmra.mxu0 %v188
    %v228 = vpop.f32.mrf.mxu0
    %v229 = vadd.f32 %v156, %v228
    %230 = vmatmul.f32.gmra.mxu0 %v191
    %v231 = vpop.f32.mrf.mxu0
    %v232 = vadd.f32 %v160, %v231
    %233 = vmatmul.f32.gmra.mxu0 %v194
    %v234 = vpop.f32.mrf.mxu0
    %v235 = vadd.f32 %v164, %v234
    %236 = vmatmul.f32.gmra.mxu0 %v197
    %v237 = vpop.f32.mrf.mxu0
    %v238 = vadd.f32 %v168, %v237
    %239 = vmatmul.f32.gmra.mxu0 %v200
    %v240 = vpop.f32.mrf.mxu0
    %v241 = vadd.f32 %v172, %v240
    %242 = vmatmul.f32.gmra.mxu0 %v203
    %v243 = vpop.f32.mrf.mxu0
    %v244 = vadd.f32 %v176, %v243
    %245 = vmatmul.f32.gmra.mxu0 %v206
    %v246 = vpop.f32.mrf.mxu0
    %v247 = vadd.f32 %v180, %v246
    %248 = vmatmul.f32.gmra.mxu0 %v209
    %v249 = vpop.f32.mrf.mxu0
    %v250 = vadd.f32 %v184, %v249
    %251 = vdwg.mxu0
    %v252 = vmax.f32 %v229, 0.0
    %v253 = vmax.f32 %v232, 0.0
    %v254 = vmax.f32 %v235, 0.0
    %v255 = vmax.f32 %v238, 0.0
    %v256 = vmax.f32 %v241, 0.0
    %v257 = vmax.f32 %v244, 0.0
    %v258 = vmax.f32 %v247, 0.0
    %v259 = vmax.f32 %v250, 0.0
    %261 = vset.pattern.permute.xlu0 2
    %262 = vperm.xlu0 %261, %v39
    %v263 = vpop.permute.xlu0 %262
    %v266 = vsel %vm186, %v30, 0
    %268 = vmatpush.msra.mxu0 0.0
    %269 = vmatpush.msra.mxu0 0.0
    %270 = vmatpush.msra.mxu0 0.0
    %271 = vmatpush.msra.mxu0 0.0
    %272 = vmatpush.msra.mxu0 0.0
    %273 = vmatpush.msra.mxu0 0.0
    %274 = vmatpush.msra.mxu0 0.0
    %275 = vmatpush.msra.mxu0 0.0
    %276 = vmatpush.msra.mxu0 %v259
    %277 = vmatpush.msra.mxu0 %v258
    %278 = vmatpush.msra.mxu0 %v257
    %279 = vmatpush.msra.mxu0 %v256
    %280 = vmatpush.msra.mxu0 %v255
    %281 = vmatpush.msra.mxu0 %v254
    %282 = vmatpush.msra.mxu0 %v253
    %283 = vmatpush.msra.mxu0 %v252
    %284 = vmatmul.f32.gmra.mxu0 %v266
    %v285 = vpop.f32.mrf.mxu0
    %v286 = vadd.f32 %v263, %v285
    %287 = vdwg.mxu0
    %vm288 = vcmask 9216
    %289 = vst.msk [vmem:[#allocation2] sm:$0x3] %vm288, %v286
    // Predicated region
    $region10: #{tpu_custom_call.1} parent=1 // pred_check
      _
    $region11: #{tpu_custom_call.1} parent=1 // pred_check_branch
      %291 = sbr.rel (0) target = $region13
    $region12: #{tpu_custom_call.1} parent=1 // pred_region
      %293 = vsyncadd [#allocation3], 0
      %s295 = sshll.u32 [#allocation2], 4
      %s296 = int_to_ptr.vmem [resolvable:$true] %s295
      %s297 = sshll.u32 %s2, 4
      %s298 = int_to_ptr.hbm [resolvable:$true] %s297
      %300 = dma.vmem_to_hbm [thread:$0]  %s296, 32, %s298, [#allocation3]
    $region13: #{tpu_custom_call.1} parent=1 // pred_fallthru
      _
    // Predicated region
    $region14: #{tpu_custom_call.1} parent=1 // pred_check
      _
    $region15: #{tpu_custom_call.1} parent=1 // pred_check_branch
      %302 = sbr.rel (0) target = $region17
    $region16: #{tpu_custom_call.1} parent=1 // pred_region
      %304 = dma.done [#allocation3], 32
    $region17: #{tpu_custom_call.1} parent=1 // pred_fallthru
      _
    %305 = vsyncpa [#allocation3], 1

</llo_original>
